<compile_context>
chip_gen: v6e
topology: v6e:2x2x1
jax: 0.10.0
libtpu: 0.0.40
codegen_flags: <defaults>
</compile_context>

<pallas_src>
import jax
import jax.numpy as jnp
from jax.experimental import pallas as pl
from jax.experimental.pallas import tpu as pltpu


def linear_kernel(params_ref, xt_ref, ot_ref):
    # params_ref: SMEM f32[4] = [w0, w1, w2, b]
    # xt_ref:     VMEM f32[3, TB]   (x transposed: batch on the lane axis)
    # ot_ref:     VMEM f32[1, TB]   (y transposed)
    x = xt_ref[...]                       # (3, TB)
    w0 = params_ref[0]
    w1 = params_ref[1]
    w2 = params_ref[2]
    b = params_ref[3]
    # Unrolled K=3 dot product on the VPU (no MXU, no XLU reduce).
    acc = x[0:1, :] * w0 + x[1:2, :] * w1 + x[2:3, :] * w2 + b
    ot_ref[...] = acc.astype(ot_ref.dtype)


def _round_up(v, m):
    return ((v + m - 1) // m) * m


def linear_pallas(x, weight, bias, *, tb=512):
    """Equivalent of torch.nn.Linear(3, 1): y = x @ W^T + b.

    x:      (B, 3)  float32
    weight: (1, 3)  float32  (PyTorch layout: (out_features, in_features))
    bias:   (1,)    float32
    returns (B, 1)  float32
    """
    B, K = x.shape
    N = weight.shape[0]
    assert K == 3 and N == 1

    # Lane-dense layout: batch on the 128-lane axis; pad to a tile multiple.
    tb = min(tb, _round_up(B, 128))       # tile is a multiple of 128 lanes
    B_pad = _round_up(B, tb)
    xt = jnp.pad(x.T, ((0, 0), (0, B_pad - B)))          # (3, B_pad)

    # Pack the 3 weights + bias into one SMEM scalar vector.
    params = jnp.concatenate(
        [weight.reshape(-1), bias.reshape(-1)]).astype(jnp.float32)  # (4,)

    grid = (B_pad // tb,)
    cost = pl.CostEstimate(
        flops=2 * B * K,
        transcendentals=0,
        bytes_accessed=4 * (B * K + K * N + N + B * N),
    )

    yt = pl.pallas_call(
        linear_kernel,
        out_shape=jax.ShapeDtypeStruct((N, B_pad), x.dtype),
        grid=grid,
        in_specs=[
            pl.BlockSpec(memory_space=pltpu.MemorySpace.SMEM),   # params (whole, SMEM)
            pl.BlockSpec((K, tb), lambda i: (0, i)),             # x^T tile, lane-dense
        ],
        out_specs=pl.BlockSpec((N, tb), lambda i: (0, i)),       # y^T tile, lane-dense
        compiler_params=pltpu.CompilerParams(
            dimension_semantics=("parallel",)),                  # megacore-shardable
        cost_estimate=cost,
    )(params, xt)

    # Undo the lane-dense transpose/padding outside the kernel.
    return yt[:, :B].T                                           # (B, 1)


def reference(x, weight, bias):
    return x @ weight.T + bias


if __name__ == "__main__":
    key = jax.random.PRNGKey(0)
    kx, kw, kb = jax.random.split(key, 3)

    # Deterministic parameter init (shapes from nn.Linear(3, 1)).
    in_features, out_features = 3, 1
    bound = 1.0 / (in_features ** 0.5)   # mirrors PyTorch's U(-1/sqrt(k), 1/sqrt(k))
    weight = jax.random.uniform(kw, (out_features, in_features),
                                dtype=jnp.float32, minval=-bound, maxval=bound)
    bias = jax.random.uniform(kb, (out_features,),
                              dtype=jnp.float32, minval=-bound, maxval=bound)

    # Small batch of inputs, (batch, in_features) = (8, 3).
    x = jax.random.normal(kx, (8, in_features), dtype=jnp.float32)

    y = linear_pallas(x, weight, bias)
    y = jax.block_until_ready(y)

    y_ref = reference(x, weight, bias)
    assert y.shape == (8, 1)
    assert jnp.allclose(y, y_ref, atol=1e-5, rtol=1e-5)

    print("KERNEL_OK")
</pallas_src>

<mosaic_0001>
module attributes {stable_mosaic.version = 11 : i64} {
  func.func @linear_kernel(%arg0: i32, %arg1: memref<4xf32, #tpu.memory_space<smem>>, %arg2: memref<3x128xf32, #tpu.memory_space<vmem>>, %arg3: memref<1x128xf32, #tpu.memory_space<vmem>>) attributes {dimension_semantics = [#tpu.dimension_semantics<parallel>], iteration_bounds = array<i64: 1>, scalar_prefetch = 0 : i64, scratch_operands = 0 : i64, tpu.core_type = #tpu.core_type<tc>, window_params = [{transform_indices = @transform_0, window_bounds = array<i64: 4>}, {transform_indices = @transform_1, window_bounds = array<i64: 3, 128>}, {transform_indices = @transform_2, window_bounds = array<i64: 1, 128>}]} {
    %c0 = arith.constant 0 : index
    %c0_0 = arith.constant 0 : index
    %0 = vector.load %arg2[%c0, %c0_0] : memref<3x128xf32, #tpu.memory_space<vmem>>, vector<3x128xf32>
    %c0_1 = arith.constant 0 : index
    %1 = memref.load %arg1[%c0_1] : memref<4xf32, #tpu.memory_space<smem>>
    %c1 = arith.constant 1 : index
    %2 = memref.load %arg1[%c1] : memref<4xf32, #tpu.memory_space<smem>>
    %c2 = arith.constant 2 : index
    %3 = memref.load %arg1[%c2] : memref<4xf32, #tpu.memory_space<smem>>
    %c3 = arith.constant 3 : index
    %4 = memref.load %arg1[%c3] : memref<4xf32, #tpu.memory_space<smem>>
    %5 = vector.extract_strided_slice %0 {offsets = [0, 0], sizes = [1, 128], strides = [1, 1]} : vector<3x128xf32> to vector<1x128xf32>
    %6 = vector.broadcast %1 : f32 to vector<1x128xf32>
    %7 = arith.mulf %5, %6 : vector<1x128xf32>
    %8 = vector.extract_strided_slice %0 {offsets = [1, 0], sizes = [1, 128], strides = [1, 1]} : vector<3x128xf32> to vector<1x128xf32>
    %9 = vector.broadcast %2 : f32 to vector<1x128xf32>
    %10 = arith.mulf %8, %9 : vector<1x128xf32>
    %11 = arith.addf %7, %10 : vector<1x128xf32>
    %12 = vector.extract_strided_slice %0 {offsets = [2, 0], sizes = [1, 128], strides = [1, 1]} : vector<3x128xf32> to vector<1x128xf32>
    %13 = vector.broadcast %3 : f32 to vector<1x128xf32>
    %14 = arith.mulf %12, %13 : vector<1x128xf32>
    %15 = arith.addf %11, %14 : vector<1x128xf32>
    %16 = vector.broadcast %4 : f32 to vector<1x128xf32>
    %17 = arith.addf %15, %16 : vector<1x128xf32>
    %c0_2 = arith.constant 0 : index
    %c0_3 = arith.constant 0 : index
    %18 = vector.load %arg3[%c0_2, %c0_3] : memref<1x128xf32, #tpu.memory_space<vmem>>, vector<1x128xf32>
    tpu.vector_store %arg3[%c0_2, %c0_3], %17 {strides = array<i32>} : memref<1x128xf32, #tpu.memory_space<vmem>>, vector<1x128xf32>,
    return
  }
  func.func @transform_0(%arg0: i32) -> i32 {
    %c0_i32 = arith.constant 0 : i32
    %c0_i32_0 = arith.constant 0 : i32
    return %c0_i32 : i32
  }
  func.func @transform_1(%arg0: i32) -> (i32, i32) {
    %c0_i32 = arith.constant 0 : i32
    %c0_i32_0 = arith.constant 0 : i32
    return %c0_i32, %arg0 : i32, i32
  }
  func.func @transform_2(%arg0: i32) -> (i32, i32) {
    %c0_i32 = arith.constant 0 : i32
    %c0_i32_0 = arith.constant 0 : i32
    return %c0_i32, %arg0 : i32, i32
  }
}

</mosaic_0001>

<llo_original>
// kernel: tpu_custom_call.1
$region0: #{tpu_custom_call.1}
  #allocation0 [shape = 'u32[]', space=smem, size = 0x4, offset = 0x4, fixed_abs, tag = 'smem constant byte address 0x4 - core index']
  #allocation1 [shape = 'u32[144,128]{1,0:T(1,128)}', space=vmem, size = 0x12000, scoped, tag = 'internal scratch']
  %s0 = inlined_call_operand.hbm [shape: f32[4], index: 0, kind: input, shape index: {}]
  %s1 = inlined_call_operand.hbm [shape: f32[3,128], index: 1, kind: input, shape index: {}]
  %s2 = inlined_call_operand.hbm [shape: f32[1,128], index: 2, kind: output, shape index: {}]
  %s3 = sld [smem:[#allocation0]]
  $region26: #{tpu_custom_call.1} parent=0
    _
  %s5 = ssub.s32 1, %s3
  %s6 = scalar_select 0, %s5, %s3
  $region1: #{tpu_custom_call.1} parent=0
    #allocation2 [shape = 'u8[512]{0}', space=smem, size = 0x200, scoped, tag = 'input window, operand 0, single buffered']
    #allocation3 [shape = 's32[1]{0}', space=sflag, size = 0x4, scoped, tag = 'scoped memory for tpu_custom_call.1']
    #allocation4 [shape = 's32[1]{0}', space=sflag, size = 0x4, scoped, tag = 'scoped memory for tpu_custom_call.1']
    #allocation5 [shape = 's32[1]{0}', space=sflag, size = 0x4, scoped, tag = 'scoped memory for tpu_custom_call.1']
    #allocation6 [shape = 'u8[2048]{0}', space=vmem, size = 0x800, scoped, tag = 'input window, operand 1, single buffered']
    #allocation7 [shape = 'u8[512]{0}', space=vmem, size = 0x400, scoped, tag = 'output window, operand 0, single buffered']
    %7 = vsyncpa [#allocation5], 0
    %8 = vsyncpa [#allocation3], 0
    %9 = vsyncpa [#allocation4], 0
    // Predicated region
    $region2: #{tpu_custom_call.1} parent=1 // pred_check
      _
    $region3: #{tpu_custom_call.1} parent=1 // pred_check_branch
      %11 = sbr.rel (0) target = $region5
    $region4: #{tpu_custom_call.1} parent=1 // pred_region
      %s13 = ssub.s32 16, 16
      %14 = vsyncadd [#allocation5], %s13
      %17 = dma.hbm_to_smem %s0, 16, [#allocation2], [#allocation5]
    $region5: #{tpu_custom_call.1} parent=1 // pred_fallthru
      _
    // Predicated region
    $region6: #{tpu_custom_call.1} parent=1 // pred_check
      _
    $region7: #{tpu_custom_call.1} parent=1 // pred_check_branch
      %19 = sbr.rel (0) target = $region9
    $region8: #{tpu_custom_call.1} parent=1 // pred_region
      %s21 = ssub.s32 64, 64
      %22 = vsyncadd [#allocation3], %s21
      %s24 = sshll.u32 [#allocation6], 4
      %s25 = int_to_ptr.vmem [resolvable:$true] %s24
      %27 = dma.hbm_to_vmem [thread:$0]  %s1, 64, %s25, [#allocation3]
    $region9: #{tpu_custom_call.1} parent=1 // pred_fallthru
      _
    // Predicated region
    $region10: #{tpu_custom_call.1} parent=1 // pred_check
      _
    $region11: #{tpu_custom_call.1} parent=1 // pred_check_branch
      %29 = sbr.rel (0) target = $region13
    $region12: #{tpu_custom_call.1} parent=1 // pred_region
      %30 = dma.done [#allocation5], 16
    $region13: #{tpu_custom_call.1} parent=1 // pred_fallthru
      _
    // Predicated region
    $region14: #{tpu_custom_call.1} parent=1 // pred_check
      _
    $region15: #{tpu_custom_call.1} parent=1 // pred_check_branch
      %32 = sbr.rel (0) target = $region17
    $region16: #{tpu_custom_call.1} parent=1 // pred_region
      %33 = dma.done [#allocation3], 64
    $region17: #{tpu_custom_call.1} parent=1 // pred_fallthru
      _
    %34 = sfence
    %v35 = vld [vmem:[#allocation6] sm:$0x7]
    %s36 = sld [smem:[#allocation2]]
    %s37 = sld [smem:[#allocation2 + $0x1]]
    %s38 = sld [smem:[#allocation2 + $0x2]]
    %s39 = sld [smem:[#allocation2 + $0x3]]
    %v40 = vstv %s36
    %v41 = vmul.f32 %v35, %v40
    %v42 = vstv %s37
    %v43 = vmul.f32 %v35, %v42
    %v45 = vrot.slane %v43, 1
    %v47 = vadd.f32 %v41, %v45
    %v48 = vstv %s38
    %v49 = vmul.f32 %v35, %v48
    %v51 = vrot.slane %v49, 2
    %v53 = vadd.f32 %v47, %v51
    %v54 = vstv %s39
    %v55 = vadd.f32 %v53, %v54
    %56 = vst [vmem:[#allocation7] sm:$0x1] %v55
    // Predicated region
    $region18: #{tpu_custom_call.1} parent=1 // pred_check
      _
    $region19: #{tpu_custom_call.1} parent=1 // pred_check_branch
      %58 = sbr.rel (0) target = $region21
    $region20: #{tpu_custom_call.1} parent=1 // pred_region
      %s60 = ssub.s32 16, 16
      %61 = vsyncadd [#allocation4], %s60
      %s63 = sshll.u32 [#allocation7], 4
      %s64 = int_to_ptr.vmem [resolvable:$true] %s63
      %66 = dma.vmem_to_hbm [thread:$0]  %s64, 16, %s2, [#allocation4]
    $region21: #{tpu_custom_call.1} parent=1 // pred_fallthru
      _
    // Predicated region
    $region22: #{tpu_custom_call.1} parent=1 // pred_check
      _
    $region23: #{tpu_custom_call.1} parent=1 // pred_check_branch
      %68 = sbr.rel (0) target = $region25
    $region24: #{tpu_custom_call.1} parent=1 // pred_region
      %69 = dma.done [#allocation4], 16
    $region25: #{tpu_custom_call.1} parent=1 // pred_fallthru
      _
    %70 = vsyncpa [#allocation3], 1
    %71 = vsyncpa [#allocation4], 1
    %72 = vsyncpa [#allocation5], 1

</llo_original>
